<compile_context>
chip_gen: v5e
topology: v5e:2x2
jax: 0.10.0
libtpu: 0.0.40
codegen_flags: <defaults>
</compile_context>

<pallas_src>
import functools

import jax
import jax.numpy as jnp
from jax.experimental import pallas as pl
from jax.experimental.pallas import tpu as pltpu

_MIB = 1024 * 1024


def _vmem_capacity_bytes():
    """Best-effort per-core VMEM capacity; conservative 64 MiB fallback."""
    try:
        info = pltpu.get_tpu_info()
        cap = getattr(info, "vmem_capacity_bytes", None)
        if cap:
            return int(cap)
    except Exception:
        pass
    return 64 * _MIB  # v7x-safe fallback


def _generation_budgets(vmem_cap):
    if vmem_cap <= 64 * _MIB:
        # v7x-class: 64 MiB per TensorCore -> stay conservative.
        return dict(target_tile_bytes=6 * _MIB,
                    max_resident_bytes=40 * _MIB,
                    vmem_limit_cap=56 * _MIB)
    # v5e / v6e class: 128 MiB VMEM -> much bigger tiles amortize step cost.
    return dict(target_tile_bytes=12 * _MIB,
                max_resident_bytes=72 * _MIB,
                vmem_limit_cap=100 * _MIB)


def _pick_block_rows(n_rows, n_cols, x_dtype, t_dtype, budgets):
    """Row-tile size: ~target_tile_bytes per x-tile, VMEM-residency capped."""
    x_item = jnp.dtype(x_dtype).itemsize
    t_item = jnp.dtype(t_dtype).itemsize
    pack = {4: 8, 2: 16, 1: 32}.get(x_item, 8)   # sublane packing per dtype

    in_row_bytes = n_cols * (x_item + t_item)            # both inputs, per row
    # Per-row residency: double-buffered inputs + f32 intermediates
    # (x_f32, exp(x-m)) + t*x product + small (.,128) dot outputs.
    resident_row_bytes = (2 * in_row_bytes
                          + 2 * n_cols * 4
                          + n_cols * max(x_item, t_item)
                          + 2048)

    br = max(pack, budgets["target_tile_bytes"] // max(1, n_cols * x_item))
    cap = max(pack, budgets["max_resident_bytes"] // max(1, resident_row_bytes))
    br = min(br, cap)
    # Keep >= 2 grid steps so a 2-TC part can shard the "parallel" axis.
    if n_rows >= 2 * pack:
        br = min(br, pl.cdiv(n_rows, 2))
    br = max(pack, (br // pack) * pack)           # round to sublane packing
    if br >= n_rows:
        return n_rows                             # full-dim block always legal
    return br


def _soft_xent_kernel(x_ref, t_ref, out_ref, *, block_rows, total_rows):
    """One row tile -> one unnormalized partial loss sum in its own SMEM slot."""
    x_raw = x_ref[...]                                # (tn, C) input dtype
    t = t_ref[...]                                    # (tn, C) input dtype (no upcast)
    x = x_raw.astype(jnp.float32)                     # (tn, C) f32 for max/exp/lse

    # Numerically stable log-sum-exp per row; max stays on VPU/XLU, exp on EUP.
    m = jnp.max(x, axis=-1, keepdims=True)            # (tn, 1)
    p = jnp.exp(x - m)                                # (tn, C) f32

    c = x.shape[-1]
    use_mxu = (c % 128 == 0)
    if use_mxu:
        # Lane reductions via the idle MXU: dot with a ones (C, 128) operand,
        # f32 accumulate, take column 0.
        tx = t * x_raw                                # product in input dtype
        ones_f32 = jnp.ones((c, 128), dtype=jnp.float32)
        ones_t = jnp.ones((c, 128), dtype=t.dtype)
        ones_tx = jnp.ones((c, 128), dtype=tx.dtype)
        sum_exp = jnp.dot(p, ones_f32,
                          preferred_element_type=jnp.float32)[:, 0:1]
        sum_t = jnp.dot(t, ones_t,
                        preferred_element_type=jnp.float32)[:, 0:1]
        sum_tx = jnp.dot(tx, ones_tx,
                         preferred_element_type=jnp.float32)[:, 0:1]
    else:
        # Non-128-multiple C: fall back to VPU/XLU lane reductions.
        t_f32 = t.astype(jnp.float32)
        sum_exp = jnp.sum(p, axis=-1, keepdims=True)
        sum_t = jnp.sum(t_f32, axis=-1, keepdims=True)
        sum_tx = jnp.sum(t_f32 * x, axis=-1, keepdims=True)

    lse = m + jnp.log(sum_exp)                        # (tn, 1)
    # sum_c(-t * (x - lse)) = sum_c(t) * lse - sum_c(t * x)
    row_loss = sum_t * lse - sum_tx                   # (tn, 1) f32

    if total_rows % block_rows != 0:
        # Tail tile: rows past total_rows contain padding garbage -> mask.
        i = pl.program_id(0)
        row_ids = i * block_rows + jax.lax.broadcasted_iota(
            jnp.int32, (block_rows, 1), 0)
        row_loss = jnp.where(row_ids < total_rows, row_loss, jnp.float32(0.0))

    out_ref[0, 0] = jnp.sum(row_loss)


def soft_target_cross_entropy(x, target, *, block_rows=None):
    """x, target: (N, C). Returns scalar float32 mean loss."""
    N, C = x.shape
    assert target.shape == (N, C)

    budgets = _generation_budgets(_vmem_capacity_bytes())
    if block_rows is None:
        block_rows = _pick_block_rows(N, C, x.dtype, target.dtype, budgets)
    num_tiles = pl.cdiv(N, block_rows)

    x_item = jnp.dtype(x.dtype).itemsize
    t_item = jnp.dtype(target.dtype).itemsize
    tile_in_bytes = block_rows * C * (x_item + t_item)
    pipeline_bytes = 2 * tile_in_bytes                # inputs, double-buffered
    # Explicit headroom for in-kernel f32 intermediates (x_f32, exp(x-m)),
    # the t*x product, and the small (tn, 128) dot outputs.
    headroom = block_rows * (2 * C * 4 + C * max(x_item, t_item) + 2048) + 2 * _MIB
    vmem_limit = int(min(budgets["vmem_limit_cap"],
                         max(32 * _MIB, pipeline_bytes + headroom)))

    kernel = functools.partial(
        _soft_xent_kernel, block_rows=block_rows, total_rows=N)

    partials = pl.pallas_call(
        kernel,
        out_shape=jax.ShapeDtypeStruct((num_tiles, 1), jnp.float32),
        grid_spec=pltpu.PrefetchScalarGridSpec(
            num_scalar_prefetch=0,
            grid=(num_tiles,),
            in_specs=[
                pl.BlockSpec((block_rows, C), lambda i: (i, 0)),
                pl.BlockSpec((block_rows, C), lambda i: (i, 0)),
            ],
            out_specs=pl.BlockSpec(
                (1, 1), lambda i: (i, 0), memory_space=pltpu.SMEM),
        ),
        compiler_params=pltpu.CompilerParams(
            dimension_semantics=("parallel",),        # no carried state
            vmem_limit_bytes=vmem_limit,
        ),
    )(x, target)

    return (jnp.sum(partials) / jnp.float32(N)).astype(jnp.float32)


def _reference(x, target):
    logp = jax.nn.log_softmax(x.astype(jnp.float32), axis=-1)
    return jnp.mean(jnp.sum(-target.astype(jnp.float32) * logp, axis=-1))


if __name__ == "__main__":
    key = jax.random.PRNGKey(0)
    k1, k2, k3, k4, k5, k6 = jax.random.split(key, 6)

    # Case 1: small tile-aligned f32 (single tile, auto block_rows, MXU reduce).
    N, C = 8, 128
    x = jax.random.normal(k1, (N, C), dtype=jnp.float32)
    target = jax.nn.softmax(jax.random.normal(k2, (N, C), dtype=jnp.float32), axis=-1)
    loss = soft_target_cross_entropy(x, target)
    jax.block_until_ready(loss)
    ref = _reference(x, target)
    assert jnp.allclose(loss, ref, atol=1e-4, rtol=1e-5), (loss, ref)

    # Case 2: multi-tile f32, rows divide evenly (parallel per-tile partials).
    N, C = 32, 128
    x = jax.random.normal(k3, (N, C), dtype=jnp.float32)
    target = jax.nn.softmax(jax.random.normal(k4, (N, C), dtype=jnp.float32), axis=-1)
    loss = soft_target_cross_entropy(x, target, block_rows=8)
    jax.block_until_ready(loss)
    ref = _reference(x, target)
    assert jnp.allclose(loss, ref, atol=1e-4, rtol=1e-5), (loss, ref)

    # Case 3: bf16 inputs with an uneven tail (masking + bf16 MXU-reduce path).
    N, C = 20, 256
    x = jax.random.normal(k5, (N, C), dtype=jnp.float32).astype(jnp.bfloat16)
    target = jax.nn.softmax(
        jax.random.normal(k6, (N, C), dtype=jnp.float32), axis=-1
    ).astype(jnp.bfloat16)
    loss = soft_target_cross_entropy(x, target, block_rows=16)
    jax.block_until_ready(loss)
    ref = _reference(x, target)
    assert jnp.allclose(loss, ref, atol=1e-3, rtol=1e-3), (loss, ref)

    print("KERNEL_OK")
</pallas_src>

<mosaic_0001>
module attributes {stable_mosaic.version = 11 : i64} {
  func.func @_soft_xent_kernel(%arg0: i32, %arg1: memref<8x128xf32, #tpu.memory_space<vmem>>, %arg2: memref<8x128xf32, #tpu.memory_space<vmem>>, %arg3: memref<1x1xf32, #tpu.memory_space<smem>>) attributes {dimension_semantics = [#tpu.dimension_semantics<parallel>], iteration_bounds = array<i64: 1>, scalar_prefetch = 0 : i64, scratch_operands = 0 : i64, tpu.core_type = #tpu.core_type<tc>, window_params = [{transform_indices = @transform_0, window_bounds = array<i64: 8, 128>}, {transform_indices = @transform_1, window_bounds = array<i64: 8, 128>}, {transform_indices = @transform_2, window_bounds = array<i64: 1, 1>}]} {
    %c0 = arith.constant 0 : index
    %c0_0 = arith.constant 0 : index
    %0 = vector.load %arg1[%c0, %c0_0] : memref<8x128xf32, #tpu.memory_space<vmem>>, vector<8x128xf32>
    %c0_1 = arith.constant 0 : index
    %c0_2 = arith.constant 0 : index
    %1 = vector.load %arg2[%c0_1, %c0_2] : memref<8x128xf32, #tpu.memory_space<vmem>>, vector<8x128xf32>
    %cst = arith.constant dense<0xFF800000> : vector<8xf32>
    %2 = vector.multi_reduction <maximumf>, %0, %cst [1] : vector<8x128xf32> to vector<8xf32>
    %3 = vector.shape_cast %2 : vector<8xf32> to vector<8x1xf32>
    %4 = vector.broadcast %3 : vector<8x1xf32> to vector<8x128xf32>
    %5 = arith.subf %0, %4 : vector<8x128xf32>
    %6 = math.exp %5 : vector<8x128xf32>
    %7 = arith.mulf %1, %0 : vector<8x128xf32>
    %cst_3 = arith.constant 1.000000e+00 : f32
    %8 = vector.broadcast %cst_3 : f32 to vector<128x128xf32>
    %cst_4 = arith.constant 1.000000e+00 : f32
    %9 = vector.broadcast %cst_4 : f32 to vector<128x128xf32>
    %cst_5 = arith.constant 1.000000e+00 : f32
    %10 = vector.broadcast %cst_5 : f32 to vector<128x128xf32>
    %cst_6 = arith.constant dense<0.000000e+00> : vector<8x128xf32>
    %11 = tpu.matmul %6, %8, %cst_6 {dimension_numbers = #tpu.dot_dimension_numbers<[1], [0], [0], [1], [0, 0, 1, 1], [], []>} : vector<8x128xf32>, vector<128x128xf32>, vector<8x128xf32> -> vector<8x128xf32>
    %12 = vector.extract_strided_slice %11 {offsets = [0, 0], sizes = [8, 1], strides = [1, 1]} : vector<8x128xf32> to vector<8x1xf32>
    %cst_7 = arith.constant dense<0.000000e+00> : vector<8x128xf32>
    %13 = tpu.matmul %1, %9, %cst_7 {dimension_numbers = #tpu.dot_dimension_numbers<[1], [0], [0], [1], [0, 0, 1, 1], [], []>} : vector<8x128xf32>, vector<128x128xf32>, vector<8x128xf32> -> vector<8x128xf32>
    %14 = vector.extract_strided_slice %13 {offsets = [0, 0], sizes = [8, 1], strides = [1, 1]} : vector<8x128xf32> to vector<8x1xf32>
    %cst_8 = arith.constant dense<0.000000e+00> : vector<8x128xf32>
    %15 = tpu.matmul %7, %10, %cst_8 {dimension_numbers = #tpu.dot_dimension_numbers<[1], [0], [0], [1], [0, 0, 1, 1], [], []>} : vector<8x128xf32>, vector<128x128xf32>, vector<8x128xf32> -> vector<8x128xf32>
    %16 = vector.extract_strided_slice %15 {offsets = [0, 0], sizes = [8, 1], strides = [1, 1]} : vector<8x128xf32> to vector<8x1xf32>
    %17 = math.log %12 : vector<8x1xf32>
    %18 = arith.addf %3, %17 : vector<8x1xf32>
    %19 = arith.mulf %14, %18 : vector<8x1xf32>
    %20 = arith.subf %19, %16 : vector<8x1xf32>
    %21 = vector.shape_cast %20 : vector<8x1xf32> to vector<1x8x1xf32>
    %cst_9 = arith.constant dense<0.000000e+00> : vector<1xf32>
    %22 = vector.multi_reduction <add>, %21, %cst_9 [1, 2] : vector<1x8x1xf32> to vector<1xf32>
    %23 = vector.shape_cast %22 : vector<1xf32> to vector<1x1x1xf32>
    %24 = vector.extract %23[0, 0, 0] : f32 from vector<1x1x1xf32>
    %c0_10 = arith.constant 0 : index
    %c0_11 = arith.constant 0 : index
    %25 = memref.load %arg3[%c0_10, %c0_11] : memref<1x1xf32, #tpu.memory_space<smem>>
    memref.store %24, %arg3[%c0_10, %c0_11] : memref<1x1xf32, #tpu.memory_space<smem>>
    return
  }
  func.func @transform_0(%arg0: i32) -> (i32, i32) {
    %c0_i32 = arith.constant 0 : i32
    %c0_i32_0 = arith.constant 0 : i32
    return %arg0, %c0_i32 : i32, i32
  }
  func.func @transform_1(%arg0: i32) -> (i32, i32) {
    %c0_i32 = arith.constant 0 : i32
    %c0_i32_0 = arith.constant 0 : i32
    return %arg0, %c0_i32 : i32, i32
  }
  func.func @transform_2(%arg0: i32) -> (i32, i32) {
    %c0_i32 = arith.constant 0 : i32
    %c0_i32_0 = arith.constant 0 : i32
    return %arg0, %c0_i32 : i32, i32
  }
}

</mosaic_0001>

<llo_original>
// kernel: tpu_custom_call.1
$region0: #{tpu_custom_call.1}
  #allocation0 [shape = 'u32[]', space=smem, size = 0x4, offset = 0x4, fixed_abs, tag = 'smem constant byte address 0x4 - core index']
  #allocation1 [shape = 'u32[72,128]{1,0:T(1,128)}', space=vmem, size = 0x9000, scoped, tag = 'internal scratch']
  %s0 = inlined_call_operand.hbm [shape: f32[8,128], index: 0, kind: input, shape index: {}]
  %s1 = inlined_call_operand.hbm [shape: f32[8,128], index: 1, kind: input, shape index: {}]
  %s2 = inlined_call_operand.hbm [shape: f32[1,1], index: 2, kind: output, shape index: {}]
  %s3 = sld [smem:[#allocation0]]
  $region26: #{tpu_custom_call.1} parent=0
    _
  %s5 = ssub.s32 1, %s3
  %s6 = scalar_select 0, %s5, %s3
  $region1: #{tpu_custom_call.1} parent=0
    #allocation2 [shape = 'u8[4096]{0}', space=vmem, size = 0x1000, scoped, tag = 'input window, operand 0, single buffered']
    #allocation3 [shape = 's32[1]{0}', space=sflag, size = 0x4, scoped, tag = 'scoped memory for tpu_custom_call.1']
    #allocation4 [shape = 's32[1]{0}', space=sflag, size = 0x4, scoped, tag = 'scoped memory for tpu_custom_call.1']
    #allocation5 [shape = 'u8[4096]{0}', space=vmem, size = 0x1000, scoped, tag = 'input window, operand 1, single buffered']
    #allocation6 [shape = 's32[1]{0}', space=sflag, size = 0x4, scoped, tag = 'scoped memory for tpu_custom_call.1']
    #allocation7 [shape = 'u8[512]{0}', space=smem, size = 0x200, scoped, tag = 'output window, operand 0, single buffered']
    %7 = vsyncpa [#allocation3], 0
    %8 = vsyncpa [#allocation6], 0
    %9 = vsyncpa [#allocation4], 0
    // Predicated region
    $region2: #{tpu_custom_call.1} parent=1 // pred_check
      _
    $region3: #{tpu_custom_call.1} parent=1 // pred_check_branch
      %11 = sbr.rel (0) target = $region5
    $region4: #{tpu_custom_call.1} parent=1 // pred_region
      %13 = vsyncadd [#allocation3], 0
      %s15 = sshll.u32 %s0, 4
      %s16 = int_to_ptr.hbm [resolvable:$true] %s15
      %s17 = sshll.u32 [#allocation2], 4
      %s18 = int_to_ptr.vmem [resolvable:$true] %s17
      %20 = dma.hbm_to_vmem [thread:$0]  %s16, 128, %s18, [#allocation3]
    $region5: #{tpu_custom_call.1} parent=1 // pred_fallthru
      _
    // Predicated region
    $region6: #{tpu_custom_call.1} parent=1 // pred_check
      _
    $region7: #{tpu_custom_call.1} parent=1 // pred_check_branch
      %22 = sbr.rel (0) target = $region9
    $region8: #{tpu_custom_call.1} parent=1 // pred_region
      %24 = vsyncadd [#allocation6], 0
      %s26 = sshll.u32 %s1, 4
      %s27 = int_to_ptr.hbm [resolvable:$true] %s26
      %s28 = sshll.u32 [#allocation5], 4
      %s29 = int_to_ptr.vmem [resolvable:$true] %s28
      %31 = dma.hbm_to_vmem [thread:$0]  %s27, 128, %s29, [#allocation6]
    $region9: #{tpu_custom_call.1} parent=1 // pred_fallthru
      _
    // Predicated region
    $region10: #{tpu_custom_call.1} parent=1 // pred_check
      _
    $region11: #{tpu_custom_call.1} parent=1 // pred_check_branch
      %33 = sbr.rel (0) target = $region13
    $region12: #{tpu_custom_call.1} parent=1 // pred_region
      %35 = dma.done [#allocation3], 128
    $region13: #{tpu_custom_call.1} parent=1 // pred_fallthru
      _
    // Predicated region
    $region14: #{tpu_custom_call.1} parent=1 // pred_check
      _
    $region15: #{tpu_custom_call.1} parent=1 // pred_check_branch
      %37 = sbr.rel (0) target = $region17
    $region16: #{tpu_custom_call.1} parent=1 // pred_region
      %39 = dma.done [#allocation6], 128
    $region17: #{tpu_custom_call.1} parent=1 // pred_fallthru
      _
    %v40 = vld [vmem:[#allocation2] sm:$0xff]
    %v41 = vld [vmem:[#allocation5] sm:$0xff]
    %42 = vmax.xlane.f32.xlu0 %v40
    %v43 = vpop.xlane.xlu0 %42
    %v44 = vsub.f32 %v40, %v43
    %v45 = vmul.f32 %v44, 1.442695
    %v46 = vpow.pop %v45
    %v47 = vmul.f32 %v41, %v40
    %48 = vmatpush.msra.mxu0 1.0
    %49 = vmatpush.msra.mxu0 1.0
    %50 = vmatpush.msra.mxu0 1.0
    %51 = vmatpush.msra.mxu0 1.0
    %52 = vmatpush.msra.mxu0 1.0
    %53 = vmatpush.msra.mxu0 1.0
    %54 = vmatpush.msra.mxu0 1.0
    %55 = vmatpush.msra.mxu0 1.0
    %56 = vmatpush.msra.mxu0 1.0
    %57 = vmatpush.msra.mxu0 1.0
    %58 = vmatpush.msra.mxu0 1.0
    %59 = vmatpush.msra.mxu0 1.0
    %60 = vmatpush.msra.mxu0 1.0
    %61 = vmatpush.msra.mxu0 1.0
    %62 = vmatpush.msra.mxu0 1.0
    %63 = vmatpush.msra.mxu0 1.0
    %64 = vmatmul.f32.gmra.mxu0 %v46
    %v65 = vpop.f32.mrf.mxu0
    %v66 = vadd.f32 0.0, %v65
    %67 = vdwg.mxu0
    %68 = vmatpush.msra.mxu0 1.0
    %69 = vmatpush.msra.mxu0 1.0
    %70 = vmatpush.msra.mxu0 1.0
    %71 = vmatpush.msra.mxu0 1.0
    %72 = vmatpush.msra.mxu0 1.0
    %73 = vmatpush.msra.mxu0 1.0
    %74 = vmatpush.msra.mxu0 1.0
    %75 = vmatpush.msra.mxu0 1.0
    %76 = vmatpush.msra.mxu0 1.0
    %77 = vmatpush.msra.mxu0 1.0
    %78 = vmatpush.msra.mxu0 1.0
    %79 = vmatpush.msra.mxu0 1.0
    %80 = vmatpush.msra.mxu0 1.0
    %81 = vmatpush.msra.mxu0 1.0
    %82 = vmatpush.msra.mxu0 1.0
    %83 = vmatpush.msra.mxu0 1.0
    %84 = vmatmul.f32.gmra.mxu0 %v41
    %v85 = vpop.f32.mrf.mxu0
    %v86 = vadd.f32 0.0, %v85
    %87 = vdwg.mxu0
    %88 = vmatpush.msra.mxu0 1.0
    %89 = vmatpush.msra.mxu0 1.0
    %90 = vmatpush.msra.mxu0 1.0
    %91 = vmatpush.msra.mxu0 1.0
    %92 = vmatpush.msra.mxu0 1.0
    %93 = vmatpush.msra.mxu0 1.0
    %94 = vmatpush.msra.mxu0 1.0
    %95 = vmatpush.msra.mxu0 1.0
    %96 = vmatpush.msra.mxu0 1.0
    %97 = vmatpush.msra.mxu0 1.0
    %98 = vmatpush.msra.mxu0 1.0
    %99 = vmatpush.msra.mxu0 1.0
    %100 = vmatpush.msra.mxu0 1.0
    %101 = vmatpush.msra.mxu0 1.0
    %102 = vmatpush.msra.mxu0 1.0
    %103 = vmatpush.msra.mxu0 1.0
    %104 = vmatmul.f32.gmra.mxu0 %v47
    %v105 = vpop.f32.mrf.mxu0
    %v106 = vadd.f32 0.0, %v105
    %107 = vdwg.mxu0
    %v108 = vlog2.pop %v66
    %v109 = vmul.f32 %v108, 0.6931472
    %v110 = vadd.f32 %v43, %v109
    %v111 = vmul.f32 %v86, %v110
    %v112 = vsub.f32 %v111, %v106
    %vm113 = vcmask 7168
    %v114 = vsel %vm113, %v112, 0.0
    %115 = vadd.xlane.f32.xlu0 %v114
    %v116 = vpop.xlane.xlu0 %115
    %v117 = vrot.slane %v116, 4
    %v118 = vadd.f32 %v116, %v117
    %v119 = vrot.slane %v118, 2
    %v120 = vadd.f32 %v118, %v119
    %v121 = vrot.slane %v120, 1
    %v122 = vadd.f32 %v120, %v121
    %s123 = vtos %v122
    %s124 = scalar_lea.smem [#allocation7], 0
    %125 = sst [smem:[%s124]] %s123
    // Predicated region
    $region18: #{tpu_custom_call.1} parent=1 // pred_check
      _
    $region19: #{tpu_custom_call.1} parent=1 // pred_check_branch
      %127 = sbr.rel (0) target = $region21
    $region20: #{tpu_custom_call.1} parent=1 // pred_region
      %129 = vsyncadd [#allocation4], 0
      %s131 = sshll.u32 %s2, 4
      %s132 = int_to_ptr.hbm [resolvable:$true] %s131
      %134 = dma.smem_to_hbm [#allocation7], 16, %s132, [#allocation4]
    $region21: #{tpu_custom_call.1} parent=1 // pred_fallthru
      _
    // Predicated region
    $region22: #{tpu_custom_call.1} parent=1 // pred_check
      _
    $region23: #{tpu_custom_call.1} parent=1 // pred_check_branch
      %136 = sbr.rel (0) target = $region25
    $region24: #{tpu_custom_call.1} parent=1 // pred_region
      %138 = dma.done [#allocation4], 16
    $region25: #{tpu_custom_call.1} parent=1 // pred_fallthru
      _
    %139 = sfence
    %140 = vsyncpa [#allocation3], 1
    %141 = vsyncpa [#allocation6], 1
    %142 = vsyncpa [#allocation4], 1

</llo_original>
